<compile_context>
chip_gen: v7x
topology: tpu7x:2x2x1
jax: 0.10.0
libtpu: 0.0.40
codegen_flags: <defaults>
</compile_context>

<pallas_src>
import jax
import jax.numpy as jnp
from jax.experimental import pallas as pl
from jax.experimental.pallas import tpu as pltpu


def _time_embedding_kernel(x_ref, w1_ref, b1_ref, w2_ref, b2_ref, o_ref):
    # x_ref : (Bp, 1)    f32
    # w1_ref: (1, Hp)    f32
    # b1_ref: (1, Hp)    f32
    # w2_ref: (Hp, tn)   bf16 (or f32)
    # b2_ref: (1, tn)    f32
    # o_ref : (Bp, tn)   f32
    #
    # linear_1: K=1 contraction == plain broadcast multiply-add on the VPU.
    h = x_ref[...] * w1_ref[...] + b1_ref[...]          # (Bp, Hp) f32
    # SiLU in f32 (sigmoid on the EUP).
    h = h * jax.nn.sigmoid(h)
    # linear_2 for this N tile on the MXU (single full-K block, f32 accumulation),
    # with b2 folded into the single output expression.
    o_ref[...] = (
        jnp.dot(h.astype(w2_ref.dtype), w2_ref[...],
                preferred_element_type=jnp.float32)
        + b2_ref[...]
    ).astype(o_ref.dtype)


def _round_up(v, m):
    return ((v + m - 1) // m) * m


def _pick_tn(hp, w2_itemsize, budget_bytes=24 << 20):
    """Largest 128-multiple divisor of hp whose double-buffered W2 tile fits the budget.

    Keeps >= 2 N tiles when hp >= 256 so the 'parallel' axis can shard across both
    TensorCores on v7x.
    """
    m = hp // 128
    cands = sorted({128 * d for d in range(1, m + 1) if m % d == 0}, reverse=True)
    prefer_multi = hp >= 256
    for cand in cands:
        if prefer_multi and cand == hp:
            continue
        if 2 * hp * cand * w2_itemsize <= budget_bytes:
            return cand
    return 128


def prepare_time_embedding_params(w1, b1, w2, b2, *, weight_dtype=jnp.bfloat16):
    """One-time weight prep (pad H to a multiple of 128, cast W2) — hoist out of the hot loop.

    w1: (1, H); b1: (H,); w2: (H, H) stored as (in, out); b2: (H,).
    Returns (w1p, b1p, w2p, b2p) padded / reshaped / casted for the kernel.
    """
    H = w2.shape[1]
    assert w1.shape == (1, H) and w2.shape == (H, H) and b1.shape == (H,) and b2.shape == (H,)
    Hp = _round_up(H, 128)
    if Hp != H:
        pad = Hp - H
        # Zero padding is exact: SiLU(0) = 0, so padded K rows contribute nothing;
        # padded N columns are sliced off on return.
        w1 = jnp.pad(w1, ((0, 0), (0, pad)))
        b1 = jnp.pad(b1, ((0, pad),))
        w2 = jnp.pad(w2, ((0, pad), (0, pad)))
        b2 = jnp.pad(b2, ((0, pad),))
    w1p = w1.astype(jnp.float32)
    b1p = b1.reshape(1, Hp).astype(jnp.float32)
    w2p = w2.astype(weight_dtype)          # bf16 halves HBM bytes for the dominant weight
    b2p = b2.reshape(1, Hp).astype(jnp.float32)
    return w1p, b1p, w2p, b2p


def time_embedding(x, w1p, b1p, w2p, b2p, *, h_out=None):
    """x: (B, 1) f32; prepared params from prepare_time_embedding_params.

    Returns (B, h_out) f32, where h_out defaults to the (padded) hidden size.
    """
    B = x.shape[0]
    Hp = w2p.shape[1]
    if h_out is None:
        h_out = Hp

    x = x.astype(jnp.float32)
    # Pad B to a multiple of 8 (full sublanes, unmasked stores, >=8-row MXU operand).
    Bp = max(8, _round_up(B, 8))
    if Bp != B:
        x = jnp.pad(x, ((0, Bp - B), (0, 0)))

    w2_itemsize = jnp.dtype(w2p.dtype).itemsize
    tn = _pick_tn(Hp, w2_itemsize)
    grid = (Hp // tn,)  # single 'parallel' N axis; K is a single full block.

    # Explicit scoped-VMEM budget (defaults: 16 MiB v5e / 32 MiB v6e,v7x).  Leave headroom
    # below v7x's 64 MiB physical VMEM per core.
    need = (
        2 * Hp * tn * w2_itemsize      # W2 tile, double-buffered
        + 2 * Bp * tn * 4              # output tile, double-buffered
        + 2 * 2 * Hp * 4               # w1 + b1 (f32), double-buffered
        + 2 * tn * 4 + 2 * Bp * 4      # b2, x
        + 2 * Bp * Hp * 4              # h intermediate + slack
    )
    vmem_limit = int(min(max(2 * need, 32 << 20), 56 << 20))

    out = pl.pallas_call(
        _time_embedding_kernel,
        out_shape=jax.ShapeDtypeStruct((Bp, Hp), jnp.float32),
        grid=grid,
        in_specs=[
            pl.BlockSpec((Bp, 1), lambda j: (0, 0)),    # x (tiny, resident)
            pl.BlockSpec((1, Hp), lambda j: (0, 0)),    # w1 (full K)
            pl.BlockSpec((1, Hp), lambda j: (0, 0)),    # b1 (full K)
            pl.BlockSpec((Hp, tn), lambda j: (0, j)),   # W2 slab (full K x N tile)
            pl.BlockSpec((1, tn), lambda j: (0, j)),    # b2 N-chunk
        ],
        out_specs=pl.BlockSpec((Bp, tn), lambda j: (0, j)),
        compiler_params=pltpu.CompilerParams(
            dimension_semantics=("parallel",),
            vmem_limit_bytes=vmem_limit,
        ),
    )(x, w1p, b1p, w2p, b2p)

    return out[:B, :h_out]


def init_params(key, n_embed):
    """Deterministic init mimicking nn.Linear defaults (uniform +-1/sqrt(fan_in)).

    Weights are stored transposed relative to PyTorch, i.e. (in, out).
    """
    H = n_embed * 4
    k1, k2, k3, k4 = jax.random.split(key, 4)
    bound1 = 1.0 / jnp.sqrt(1.0)   # fan_in of linear_1 is 1
    bound2 = 1.0 / jnp.sqrt(float(H))
    w1 = jax.random.uniform(k1, (1, H), jnp.float32, -bound1, bound1)
    b1 = jax.random.uniform(k2, (H,), jnp.float32, -bound1, bound1)
    w2 = jax.random.uniform(k3, (H, H), jnp.float32, -bound2, bound2)
    b2 = jax.random.uniform(k4, (H,), jnp.float32, -bound2, bound2)
    return w1, b1, w2, b2


def time_embedding_ref(x, w1, b1, w2, b2, weight_dtype=jnp.bfloat16):
    """JAX reference using the same bf16 weight/activation casting as the kernel."""
    h = x * w1 + b1              # K=1 contraction == broadcast FMA
    h = h * jax.nn.sigmoid(h)
    out = jnp.dot(h.astype(weight_dtype), w2.astype(weight_dtype),
                  preferred_element_type=jnp.float32) + b2
    return out


def time_embedding_ref_f32(x, w1, b1, w2, b2):
    h = x @ w1 + b1
    h = h * jax.nn.sigmoid(h)
    return h @ w2 + b2


if __name__ == "__main__":
    n_embed = 32          # hidden = 4 * n_embed = 128
    batch = 4

    key = jax.random.PRNGKey(0)
    kx, kp = jax.random.split(key)
    x = jax.random.normal(kx, (batch, 1), jnp.float32)   # timestep scalar per batch elem
    w1, b1, w2, b2 = init_params(kp, n_embed)
    H = n_embed * 4

    # Default (perf) path: bf16 W2 streaming, f32 MXU accumulation.
    params_bf16 = prepare_time_embedding_params(w1, b1, w2, b2, weight_dtype=jnp.bfloat16)
    out = jax.block_until_ready(time_embedding(x, *params_bf16, h_out=H))
    assert out.shape == (batch, H)

    ref_bf16 = time_embedding_ref(x, w1, b1, w2, b2, weight_dtype=jnp.bfloat16)
    assert jnp.allclose(out, ref_bf16, atol=1e-2, rtol=1e-2), "mismatch vs bf16-matched reference"

    ref_f32 = time_embedding_ref_f32(x, w1, b1, w2, b2)
    assert jnp.allclose(out, ref_f32, atol=5e-2, rtol=5e-2), "mismatch vs f32 reference"

    # Exact-semantics path: f32 W2 (matches the PyTorch module's f32 math).
    params_f32 = prepare_time_embedding_params(w1, b1, w2, b2, weight_dtype=jnp.float32)
    out_f32 = jax.block_until_ready(time_embedding(x, *params_f32, h_out=H))
    assert jnp.allclose(out_f32, ref_f32, atol=1e-3, rtol=1e-3), "mismatch vs f32 reference (f32 W2)"

    print("KERNEL_OK")
</pallas_src>

<mosaic_0001>
module attributes {stable_mosaic.version = 11 : i64} {
  func.func @_time_embedding_kernel(%arg0: i32, %arg1: memref<8x1xf32, #tpu.memory_space<vmem>>, %arg2: memref<1x128xf32, #tpu.memory_space<vmem>>, %arg3: memref<1x128xf32, #tpu.memory_space<vmem>>, %arg4: memref<128x128xbf16, #tpu.memory_space<vmem>>, %arg5: memref<1x128xf32, #tpu.memory_space<vmem>>, %arg6: memref<8x128xf32, #tpu.memory_space<vmem>>) attributes {dimension_semantics = [#tpu.dimension_semantics<parallel>], iteration_bounds = array<i64: 1>, scalar_prefetch = 0 : i64, scratch_operands = 0 : i64, tpu.core_type = #tpu.core_type<tc>, window_params = [{pipeline_mode = #tpu.pipeline_mode<synchronous>, transform_indices = @transform_0, window_bounds = array<i64: 8, 1>}, {pipeline_mode = #tpu.pipeline_mode<synchronous>, transform_indices = @transform_1, window_bounds = array<i64: 1, 128>}, {pipeline_mode = #tpu.pipeline_mode<synchronous>, transform_indices = @transform_2, window_bounds = array<i64: 1, 128>}, {transform_indices = @transform_3, window_bounds = array<i64: 128, 128>}, {transform_indices = @transform_4, window_bounds = array<i64: 1, 128>}, {transform_indices = @transform_5, window_bounds = array<i64: 8, 128>}]} {
    %c0 = arith.constant 0 : index
    %c0_0 = arith.constant 0 : index
    %0 = vector.load %arg1[%c0, %c0_0] : memref<8x1xf32, #tpu.memory_space<vmem>>, vector<8x1xf32>
    %c0_1 = arith.constant 0 : index
    %c0_2 = arith.constant 0 : index
    %1 = vector.load %arg2[%c0_1, %c0_2] : memref<1x128xf32, #tpu.memory_space<vmem>>, vector<1x128xf32>
    %2 = vector.broadcast %0 : vector<8x1xf32> to vector<8x128xf32>
    %3 = vector.broadcast %1 : vector<1x128xf32> to vector<8x128xf32>
    %4 = arith.mulf %2, %3 : vector<8x128xf32>
    %c0_3 = arith.constant 0 : index
    %c0_4 = arith.constant 0 : index
    %5 = vector.load %arg3[%c0_3, %c0_4] : memref<1x128xf32, #tpu.memory_space<vmem>>, vector<1x128xf32>
    %6 = vector.broadcast %5 : vector<1x128xf32> to vector<8x128xf32>
    %7 = arith.addf %4, %6 : vector<8x128xf32>
    %8 = arith.negf %7 : vector<8x128xf32>
    %9 = math.exp %8 : vector<8x128xf32>
    %cst = arith.constant 1.000000e+00 : f32
    %10 = vector.broadcast %cst : f32 to vector<8x128xf32>
    %11 = arith.addf %10, %9 : vector<8x128xf32>
    %12 = arith.divf %10, %11 : vector<8x128xf32>
    %13 = arith.mulf %7, %12 : vector<8x128xf32>
    %14 = arith.truncf %13 : vector<8x128xf32> to vector<8x128xbf16>
    %c0_5 = arith.constant 0 : index
    %c0_6 = arith.constant 0 : index
    %15 = vector.load %arg4[%c0_5, %c0_6] : memref<128x128xbf16, #tpu.memory_space<vmem>>, vector<128x128xbf16>
    %cst_7 = arith.constant dense<0.000000e+00> : vector<8x128xf32>
    %16 = tpu.matmul %14, %15, %cst_7 {dimension_numbers = #tpu.dot_dimension_numbers<[1], [0], [0], [1], [0, 0, 1, 1], [], []>} : vector<8x128xbf16>, vector<128x128xbf16>, vector<8x128xf32> -> vector<8x128xf32>
    %c0_8 = arith.constant 0 : index
    %c0_9 = arith.constant 0 : index
    %17 = vector.load %arg5[%c0_8, %c0_9] : memref<1x128xf32, #tpu.memory_space<vmem>>, vector<1x128xf32>
    %18 = vector.broadcast %17 : vector<1x128xf32> to vector<8x128xf32>
    %19 = arith.addf %16, %18 : vector<8x128xf32>
    %c0_10 = arith.constant 0 : index
    %c0_11 = arith.constant 0 : index
    %20 = vector.load %arg6[%c0_10, %c0_11] : memref<8x128xf32, #tpu.memory_space<vmem>>, vector<8x128xf32>
    tpu.vector_store %arg6[%c0_10, %c0_11], %19 {strides = array<i32>} : memref<8x128xf32, #tpu.memory_space<vmem>>, vector<8x128xf32>,
    return
  }
  func.func @transform_0(%arg0: i32) -> (i32, i32) {
    %c0_i32 = arith.constant 0 : i32
    %c0_i32_0 = arith.constant 0 : i32
    %c0_i32_1 = arith.constant 0 : i32
    return %c0_i32, %c0_i32_0 : i32, i32
  }
  func.func @transform_1(%arg0: i32) -> (i32, i32) {
    %c0_i32 = arith.constant 0 : i32
    %c0_i32_0 = arith.constant 0 : i32
    %c0_i32_1 = arith.constant 0 : i32
    return %c0_i32, %c0_i32_0 : i32, i32
  }
  func.func @transform_2(%arg0: i32) -> (i32, i32) {
    %c0_i32 = arith.constant 0 : i32
    %c0_i32_0 = arith.constant 0 : i32
    %c0_i32_1 = arith.constant 0 : i32
    return %c0_i32, %c0_i32_0 : i32, i32
  }
  func.func @transform_3(%arg0: i32) -> (i32, i32) {
    %c0_i32 = arith.constant 0 : i32
    %c0_i32_0 = arith.constant 0 : i32
    return %c0_i32, %arg0 : i32, i32
  }
  func.func @transform_4(%arg0: i32) -> (i32, i32) {
    %c0_i32 = arith.constant 0 : i32
    %c0_i32_0 = arith.constant 0 : i32
    return %c0_i32, %arg0 : i32, i32
  }
  func.func @transform_5(%arg0: i32) -> (i32, i32) {
    %c0_i32 = arith.constant 0 : i32
    %c0_i32_0 = arith.constant 0 : i32
    return %c0_i32, %arg0 : i32, i32
  }
}

</mosaic_0001>

<llo_original>
// kernel: tpu_custom_call.1
$region0: #{tpu_custom_call.1}
  #allocation0 [shape = 'u32[]', space=smem, size = 0x4, offset = 0x4, fixed_abs, tag = 'smem constant byte address 0x4 - core index']
  #allocation1 [shape = 'u32[144,128]{1,0:T(1,128)}', space=vmem, size = 0x12000, scoped, tag = 'internal scratch']
  %s0 = inlined_call_operand.vmem [shape: f32[8,1], index: 0, kind: input, shape index: {}]
  %s1 = inlined_call_operand.vmem [shape: f32[1,128], index: 1, kind: input, shape index: {}]
  %s2 = inlined_call_operand.vmem [shape: f32[1,128], index: 2, kind: input, shape index: {}]
  %s3 = inlined_call_operand.hbm [shape: bf16[128,128], index: 3, kind: input, shape index: {}]
  %s4 = inlined_call_operand.vmem [shape: f32[1,128], index: 4, kind: input, shape index: {}]
  %s5 = inlined_call_operand.hbm [shape: f32[8,128], index: 5, kind: output, shape index: {}]
  %s6 = sld [smem:[#allocation0]]
  $region34: #{tpu_custom_call.1} parent=0
    _
  %s8 = ssub.s32 1, %s6
  %s9 = scalar_select 0, %s8, %s6
  $region1: #{tpu_custom_call.1} parent=0
    #allocation2 [shape = 'u8[32768]{0}', space=vmem, size = 0x8000, scoped, tag = 'input window, operand 3, single buffered']
    #allocation3 [shape = 's32[1]{0}', space=sflag, size = 0x4, scoped, tag = 'scoped memory for tpu_custom_call.1']
    #allocation4 [shape = 's32[1]{0}', space=sflag, size = 0x4, scoped, tag = 'scoped memory for tpu_custom_call.1']
    #allocation5 [shape = 'u8[4096]{0}', space=vmem, size = 0x1000, scoped, tag = 'output window, operand 0, single buffered']
    %10 = vsyncpa [#allocation3], 0
    %11 = vsyncpa [#allocation4], 0
    // Predicated region
    $region2: #{tpu_custom_call.1} parent=1 // pred_check
      _
    $region3: #{tpu_custom_call.1} parent=1 // pred_check_branch
      %13 = sbr.rel (0) target = $region5
    $region4: #{tpu_custom_call.1} parent=1 // pred_region
      _
    $region5: #{tpu_custom_call.1} parent=1 // pred_fallthru
      _
    // Predicated region
    $region6: #{tpu_custom_call.1} parent=1 // pred_check
      _
    $region7: #{tpu_custom_call.1} parent=1 // pred_check_branch
      %15 = sbr.rel (0) target = $region9
    $region8: #{tpu_custom_call.1} parent=1 // pred_region
      _
    $region9: #{tpu_custom_call.1} parent=1 // pred_fallthru
      _
    // Predicated region
    $region10: #{tpu_custom_call.1} parent=1 // pred_check
      _
    $region11: #{tpu_custom_call.1} parent=1 // pred_check_branch
      %17 = sbr.rel (0) target = $region13
    $region12: #{tpu_custom_call.1} parent=1 // pred_region
      _
    $region13: #{tpu_custom_call.1} parent=1 // pred_fallthru
      _
    // Predicated region
    $region14: #{tpu_custom_call.1} parent=1 // pred_check
      _
    $region15: #{tpu_custom_call.1} parent=1 // pred_check_branch
      %19 = sbr.rel (0) target = $region17
    $region16: #{tpu_custom_call.1} parent=1 // pred_region
      %s21 = ssub.s32 1024, 1024
      %22 = vsyncadd [#allocation3], %s21
      %s23 = sshll.u32 [#allocation2], 4
      %s24 = int_to_ptr.vmem [resolvable:$true] %s23
      %29 = dma.hbm_to_vmem [thread:$0]  %s3, 1024, %s24, [#allocation3], 64, 64, 4
    $region17: #{tpu_custom_call.1} parent=1 // pred_fallthru
      _
    // Predicated region
    $region18: #{tpu_custom_call.1} parent=1 // pred_check
      _
    $region19: #{tpu_custom_call.1} parent=1 // pred_check_branch
      %31 = sbr.rel (0) target = $region21
    $region20: #{tpu_custom_call.1} parent=1 // pred_region
      _
    $region21: #{tpu_custom_call.1} parent=1 // pred_fallthru
      _
    // Predicated region
    $region22: #{tpu_custom_call.1} parent=1 // pred_check
      _
    $region23: #{tpu_custom_call.1} parent=1 // pred_check_branch
      %33 = sbr.rel (0) target = $region25
    $region24: #{tpu_custom_call.1} parent=1 // pred_region
      %34 = dma.done [#allocation3], 1024
    $region25: #{tpu_custom_call.1} parent=1 // pred_fallthru
      _
    %v36 = vld [vmem:[%s0] sm:$0xff]
    %v37 = vld [vmem:[%s1] sm:$0x1]
    %39 = vset.pattern.permute.xlu0 0
    %40 = vperm.xlu0 %39, %v36
    %v41 = vpop.permute.xlu0 %40
    %v44 = vlaneseq
    %v45 = vshrl.u32 %v44, 7
    %v46 = vsub.s32 0, %v45
    %v47 = vrot.slane %v37, %v46
    %v49 = vmul.f32 %v41, %v47
    %v50 = vld [vmem:[%s2] sm:$0x1]
    %v52 = vlaneseq
    %v53 = vshrl.u32 %v52, 7
    %v54 = vsub.s32 0, %v53
    %v55 = vrot.slane %v50, %v54
    %v57 = vadd.f32 %v49, %v55
    %v58 = vxor.u32 %v57, 2147483648
    %v59 = vmul.f32 %v58, 1.442695
    %v60 = vpow.pop %v59
    %v61 = vadd.f32 %v60, 1.0
    %v62 = vrcp.pop %v61
    %v63 = vmul.f32 1.0, %v62
    %v64 = vmul.f32 %v57, %v63
    %v65 = vpack.c.bf16 %v64, %v64
    %v66 = vld [vmem:[#allocation2] sm:$0xf]
    %v67 = vld [vmem:[#allocation2 + $0x4] sm:$0xf]
    %v68 = vld [vmem:[#allocation2 + $0x8] sm:$0xf]
    %v69 = vld [vmem:[#allocation2 + $0xc] sm:$0xf]
    %v70 = vld [vmem:[#allocation2 + $0x10] sm:$0xf]
    %v71 = vld [vmem:[#allocation2 + $0x14] sm:$0xf]
    %v72 = vld [vmem:[#allocation2 + $0x18] sm:$0xf]
    %v73 = vld [vmem:[#allocation2 + $0x1c] sm:$0xf]
    %v74 = vld [vmem:[#allocation2 + $0x20] sm:$0xf]
    %v75 = vld [vmem:[#allocation2 + $0x24] sm:$0xf]
    %v76 = vld [vmem:[#allocation2 + $0x28] sm:$0xf]
    %v77 = vld [vmem:[#allocation2 + $0x2c] sm:$0xf]
    %v78 = vld [vmem:[#allocation2 + $0x30] sm:$0xf]
    %v79 = vld [vmem:[#allocation2 + $0x34] sm:$0xf]
    %v80 = vld [vmem:[#allocation2 + $0x38] sm:$0xf]
    %v81 = vld [vmem:[#allocation2 + $0x3c] sm:$0xf]
    %v82 = vld [vmem:[%s4] sm:$0x1]
    %v84 = vlaneseq
    %v85 = vshrl.u32 %v84, 7
    %v86 = vsub.s32 0, %v85
    %v87 = vrot.slane %v82, %v86
    %v105 = vunpack.c.l.b16 %v66
    %v106 = vunpack.c.l.b16 %v67
    %v107 = vunpack.c.l.b16 %v68
    %v108 = vunpack.c.l.b16 %v69
    %v109 = vunpack.c.l.b16 %v70
    %v110 = vunpack.c.l.b16 %v71
    %v111 = vunpack.c.l.b16 %v72
    %v112 = vunpack.c.l.b16 %v73
    %v113 = vunpack.c.l.b16 %v74
    %v114 = vunpack.c.l.b16 %v75
    %v115 = vunpack.c.l.b16 %v76
    %v116 = vunpack.c.l.b16 %v77
    %v117 = vunpack.c.l.b16 %v78
    %v118 = vunpack.c.l.b16 %v79
    %v119 = vunpack.c.l.b16 %v80
    %v120 = vunpack.c.l.b16 %v81
    %v121 = vpack.c.b16 %v106, %v105
    %v122 = vpack.c.b16 %v108, %v107
    %v123 = vpack.c.b16 %v110, %v109
    %v124 = vpack.c.b16 %v112, %v111
    %v125 = vpack.c.b16 %v114, %v113
    %v126 = vpack.c.b16 %v116, %v115
    %v127 = vpack.c.b16 %v118, %v117
    %v128 = vpack.c.b16 %v120, %v119
    %137 = vmatprep.subr.bf16.mxu0 0
    %138 = vmatpush1.bf16.msra.mxu0 %v121
    %139 = vmatprep.subr.bf16.mxu0 0
    %140 = vmatpush1.bf16.msra.mxu0 %v122
    %141 = vmatprep.subr.bf16.mxu0 0
    %142 = vmatpush1.bf16.msra.mxu0 %v123
    %143 = vmatprep.subr.bf16.mxu0 0
    %144 = vmatpush1.bf16.msra.mxu0 %v124
    %145 = vmatprep.subr.bf16.mxu0 0
    %146 = vmatpush1.bf16.msra.mxu0 %v125
    %147 = vmatprep.subr.bf16.mxu0 0
    %148 = vmatpush1.bf16.msra.mxu0 %v126
    %149 = vmatprep.subr.bf16.mxu0 0
    %150 = vmatpush1.bf16.msra.mxu0 %v127
    %151 = vmatprep.subr.bf16.mxu0 0
    %152 = vmatpush1.bf16.msra.mxu0 %v128
    %153 = vmatprep.subr.bf16.mxu0 0
    %154 = vmatpush1.bf16.msra.mxu0 0
    %155 = vmatprep.subr.bf16.mxu0 0
    %156 = vmatpush1.bf16.msra.mxu0 0
    %157 = vmatprep.subr.bf16.mxu0 0
    %158 = vmatpush1.bf16.msra.mxu0 0
    %159 = vmatprep.subr.bf16.mxu0 0
    %160 = vmatpush1.bf16.msra.mxu0 0
    %161 = vmatprep.subr.bf16.mxu0 0
    %162 = vmatpush1.bf16.msra.mxu0 0
    %163 = vmatprep.subr.bf16.mxu0 0
    %164 = vmatpush1.bf16.msra.mxu0 0
    %165 = vmatprep.subr.bf16.mxu0 0
    %166 = vmatpush1.bf16.msra.mxu0 0
    %167 = vmatprep.subr.bf16.mxu0 0
    %168 = vmatpush1.bf16.msra.mxu0 0
    %169 = vmatprep.mubr.bf16.mxu0 0
    %170 = vmatmul.mubr.bf16.gmra.mrb[0].mxu0 %v65
    %v171 = vpop.f32.mrb[0].mxu0
    %v172 = vadd.f32 %v87, %v171
    %v173 = vpop.f32.mrb[0].mxu0
    %v174 = vpop.f32.mrb[0].mxu0
    %v175 = vpop.f32.mrb[0].mxu0
    %176 = vdwg.mxu0
    %177 = vst [vmem:[#allocation5] sm:$0xff] %v172
    // Predicated region
    $region26: #{tpu_custom_call.1} parent=1 // pred_check
      _
    $region27: #{tpu_custom_call.1} parent=1 // pred_check_branch
      %179 = sbr.rel (0) target = $region29
    $region28: #{tpu_custom_call.1} parent=1 // pred_region
      %s181 = ssub.s32 128, 128
      %182 = vsyncadd [#allocation4], %s181
      %s184 = sshll.u32 [#allocation5], 4
      %s185 = int_to_ptr.vmem [resolvable:$true] %s184
      %187 = dma.vmem_to_hbm [thread:$0]  %s185, 128, %s5, [#allocation4]
    $region29: #{tpu_custom_call.1} parent=1 // pred_fallthru
      _
    // Predicated region
    $region30: #{tpu_custom_call.1} parent=1 // pred_check
      _
    $region31: #{tpu_custom_call.1} parent=1 // pred_check_branch
      %189 = sbr.rel (0) target = $region33
    $region32: #{tpu_custom_call.1} parent=1 // pred_region
      %190 = dma.done [#allocation4], 128
    $region33: #{tpu_custom_call.1} parent=1 // pred_fallthru
      _
    %191 = vsyncpa [#allocation3], 1
    %192 = vsyncpa [#allocation4], 1

</llo_original>
